<compile_context>
chip_gen: v5e
topology: v5e:2x2
jax: 0.10.0
libtpu: 0.0.40
codegen_flags: <defaults>
</compile_context>

<pallas_src>
import functools

import jax
import jax.numpy as jnp
from jax.experimental import pallas as pl
from jax.experimental.pallas import tpu as pltpu

LANE = 128  # TPU lane width; all layer *output* dims are padded to this.


def _round_up(x, m):
    return ((x + m - 1) // m) * m


def actor_mlp_kernel(x_ref, w0_ref, wmid_ref, wlast_ref, b_ref, o_ref,
                     *, num_layers):
    """Fused MLP over one batch tile.

    x_ref:     (TILE_B, state_dim) f32   input tile, natural (unpadded) last dim
    w0_ref:    (state_dim, 128)    bf16  layer-0 weight, true-K contraction
    wmid_ref:  (n_mid, 128, 128)   bf16  layers 1..L-2, lane/K padded to 128
    wlast_ref: (128, 128)          f32   final (action-mean) layer, padded
    b_ref:     (L, 1, 128)         f32   biases, lane padded
    o_ref:     (TILE_B, 128)       f32   lane-dense padded output tile
    """
    # Layer 0: bf16 operands feeding the MXU, f32 accumulate, f32 bias add.
    a = jnp.dot(x_ref[...].astype(jnp.bfloat16), w0_ref[...],
                preferred_element_type=jnp.float32) + b_ref[0]

    # Hidden chain (layers 1 .. L-2): f32 tanh (EUP), bf16 dot, f32 accumulate.
    for l in range(num_layers - 2):
        a = jnp.dot(jnp.tanh(a).astype(jnp.bfloat16), wmid_ref[l],
                    preferred_element_type=jnp.float32) + b_ref[l + 1]

    # Final action-mean layer kept fully f32 for tight agreement with the
    # reference (it is the policy output).
    a = jnp.dot(jnp.tanh(a), wlast_ref[...],
                preferred_element_type=jnp.float32) + b_ref[num_layers - 1]

    o_ref[...] = a.astype(o_ref.dtype)


def pack_params(params):
    """Pack per-layer (W, b) (W stored (in, out)) into kernel operands.

    Returns:
      w0:     (state_dim, 128) bf16   layer-0 weight (true contraction dim)
      wmid:   (max(L-2,1), 128, 128) bf16   layers 1..L-2, zero padded
      wlast:  (128, 128) f32          final layer, zero padded
      biases: (L, 1, 128) f32         zero padded
    Zero padding is exact: padded activation columns are 0 (zero weight cols +
    zero bias), tanh(0)=0, and padded weight rows are 0, so real outputs match
    the unpadded math.
    """
    num_layers = len(params)
    # TODO(synk): degenerate hidden_layers=[] (single Linear) not handled by
    # this packed path; it is a trivial single-matmul kernel if ever needed.
    assert num_layers >= 2, "pack_params expects at least one hidden layer"

    state_dim, fan_out0 = params[0][0].shape
    assert fan_out0 <= LANE, "layer wider than 128 lanes"
    w0 = jnp.zeros((state_dim, LANE), jnp.bfloat16)
    w0 = w0.at[:, :fan_out0].set(params[0][0].astype(jnp.bfloat16))

    n_mid = max(num_layers - 2, 1)
    wmid = jnp.zeros((n_mid, LANE, LANE), jnp.bfloat16)
    for l in range(1, num_layers - 1):
        w = params[l][0]
        fi, fo = w.shape
        assert fi <= LANE and fo <= LANE, "layer wider than 128 lanes"
        wmid = wmid.at[l - 1, :fi, :fo].set(w.astype(jnp.bfloat16))

    w_last = params[-1][0]
    fi, fo = w_last.shape
    assert fi <= LANE and fo <= LANE, "layer wider than 128 lanes"
    wlast = jnp.zeros((LANE, LANE), jnp.float32)
    wlast = wlast.at[:fi, :fo].set(w_last.astype(jnp.float32))

    biases = jnp.zeros((num_layers, 1, LANE), jnp.float32)
    for l, (_, b) in enumerate(params):
        bv = b.reshape(-1).astype(jnp.float32)
        biases = biases.at[l, 0, :bv.shape[0]].set(bv)

    return w0, wmid, wlast, biases


def actor_continuous_forward(state, params, *, tile_b=1024):
    """Fused Pallas forward of the actor MLP.

    state:  (batch, state_dim) float32
    params: list of (W, b) with W shaped (in, out), b shaped (1, out)
    returns (batch, action_dim) float32  (the action mean)
    """
    batch, state_dim = state.shape
    action_dim = params[-1][0].shape[1]
    num_layers = len(params)

    w0, wmid, wlast, biases = pack_params(params)
    n_mid = wmid.shape[0]

    # Batch tiling: tile is a sublane multiple of 8, and we prefer >= 2 grid
    # steps so the "parallel" batch axis shards across v7x's two TensorCores.
    padded_batch = _round_up(batch, 8)
    if padded_batch >= 16:
        tile_b = min(tile_b, _round_up(padded_batch, 16) // 2)
    tile_b = max(8, min(tile_b, padded_batch))
    padded_batch = _round_up(padded_batch, tile_b)
    grid = (padded_batch // tile_b,)

    # Pad only the batch dim (no lane padding of the input in the wrapper).
    x = state.astype(jnp.float32)
    if padded_batch != batch:
        x = jnp.pad(x, ((0, padded_batch - batch), (0, 0)))

    flops = 2 * padded_batch * LANE * (state_dim + (num_layers - 1) * LANE)
    transcendentals = (num_layers - 1) * padded_batch * LANE
    bytes_accessed = (4 * x.size + 2 * (w0.size + wmid.size)
                      + 4 * wlast.size + 4 * biases.size
                      + 4 * padded_batch * LANE)

    out = pl.pallas_call(
        functools.partial(actor_mlp_kernel, num_layers=num_layers),
        out_shape=jax.ShapeDtypeStruct((padded_batch, LANE), jnp.float32),
        grid_spec=pltpu.PrefetchScalarGridSpec(
            num_scalar_prefetch=0,
            grid=grid,
            in_specs=[
                # Batch tile of the input, natural last dim, pipelined.
                pl.BlockSpec((tile_b, state_dim), lambda i: (i, 0)),
                # Weights/biases: constant block index -> DMA'd once, resident
                # in VMEM across all grid steps.
                pl.BlockSpec((state_dim, LANE), lambda i: (0, 0)),
                pl.BlockSpec((n_mid, LANE, LANE), lambda i: (0, 0, 0)),
                pl.BlockSpec((LANE, LANE), lambda i: (0, 0)),
                pl.BlockSpec((num_layers, 1, LANE), lambda i: (0, 0, 0)),
            ],
            out_specs=pl.BlockSpec((tile_b, LANE), lambda i: (i, 0)),
        ),
        compiler_params=pltpu.CompilerParams(
            dimension_semantics=("parallel",)),
        cost_estimate=pl.CostEstimate(
            flops=flops,
            transcendentals=transcendentals,
            bytes_accessed=bytes_accessed),
    )(x, w0, wmid, wlast, biases)

    # Slice back to the logical (batch, action_dim) result.
    return out[:batch, :action_dim]


def init_actor_params(key, state_dim, action_dim,
                      hidden_layers=(64, 32, 32),
                      output_layer_init_std=0.2):
    """Deterministic init mirroring the PyTorch module's __init__.

    - Hidden layers: kaiming_normal_ with nonlinearity='tanh'
        std = gain * sqrt(1 / fan_in), gain(tanh) = 5/3; bias = 0
    - Output layer: normal(mean=0, std=output_layer_init_std), bias = 0
    Weights returned in (in, out) layout (transpose of PyTorch storage).
    """
    dims = [state_dim] + list(hidden_layers) + [action_dim]
    params = []
    n_layers = len(dims) - 1
    keys = jax.random.split(key, n_layers)
    gain_tanh = 5.0 / 3.0
    for i in range(n_layers):
        fan_in, fan_out = dims[i], dims[i + 1]
        if i < n_layers - 1:
            std = gain_tanh / jnp.sqrt(jnp.float32(fan_in))
        else:
            std = jnp.float32(output_layer_init_std)
        w = std * jax.random.normal(keys[i], (fan_in, fan_out), dtype=jnp.float32)
        b = jnp.zeros((1, fan_out), dtype=jnp.float32)
        params.append((w, b))
    return params


def reference_forward(state, params):
    """Pure-JAX f32 reference of the PyTorch forward, for verification."""
    w, b = params[0]
    a = state @ w + b
    for w, b in params[1:]:
        a = jnp.tanh(a) @ w + b
    return a


if __name__ == "__main__":
    state_dim = 16
    action_dim = 4
    hidden_layers = (64, 32, 32)

    key = jax.random.PRNGKey(0)
    k_state, k_state2, k_params = jax.random.split(key, 3)
    params = init_actor_params(k_params, state_dim, action_dim, hidden_layers)

    # Case 1: batch=6 (not a multiple of 8) -> exercises the pad/slice path,
    # single-step grid.
    state = jax.random.normal(k_state, (6, state_dim), dtype=jnp.float32)
    out = jax.block_until_ready(actor_continuous_forward(state, params))
    ref = reference_forward(state, params)
    assert out.shape == (6, action_dim)
    assert jnp.allclose(out, ref, atol=5e-2, rtol=5e-2), (
        "mismatch vs reference (batch=6): max abs diff = "
        f"{float(jnp.max(jnp.abs(out - ref)))}")

    # Case 2: batch=64 -> tile is clamped to 32 so the grid has 2 parallel
    # steps (multi-tile / megacore path).
    state2 = jax.random.normal(k_state2, (64, state_dim), dtype=jnp.float32)
    out2 = jax.block_until_ready(actor_continuous_forward(state2, params))
    ref2 = reference_forward(state2, params)
    assert out2.shape == (64, action_dim)
    assert jnp.allclose(out2, ref2, atol=5e-2, rtol=5e-2), (
        "mismatch vs reference (batch=64): max abs diff = "
        f"{float(jnp.max(jnp.abs(out2 - ref2)))}")

    print("KERNEL_OK")
</pallas_src>

<mosaic_0001>
module attributes {stable_mosaic.version = 11 : i64} {
  func.func @actor_mlp_kernel(%arg0: i32, %arg1: memref<8x16xf32, #tpu.memory_space<vmem>>, %arg2: memref<16x128xbf16, #tpu.memory_space<vmem>>, %arg3: memref<2x128x128xbf16, #tpu.memory_space<vmem>>, %arg4: memref<128x128xf32, #tpu.memory_space<vmem>>, %arg5: memref<4x1x128xf32, #tpu.memory_space<vmem>>, %arg6: memref<8x128xf32, #tpu.memory_space<vmem>>) attributes {dimension_semantics = [#tpu.dimension_semantics<parallel>], iteration_bounds = array<i64: 1>, scalar_prefetch = 0 : i64, scratch_operands = 0 : i64, tpu.core_type = #tpu.core_type<tc>, window_params = [{transform_indices = @transform_0, window_bounds = array<i64: 8, 16>}, {pipeline_mode = #tpu.pipeline_mode<synchronous>, transform_indices = @transform_1, window_bounds = array<i64: 16, 128>}, {pipeline_mode = #tpu.pipeline_mode<synchronous>, transform_indices = @transform_2, window_bounds = array<i64: 2, 128, 128>}, {pipeline_mode = #tpu.pipeline_mode<synchronous>, transform_indices = @transform_3, window_bounds = array<i64: 128, 128>}, {pipeline_mode = #tpu.pipeline_mode<synchronous>, transform_indices = @transform_4, window_bounds = array<i64: 4, 1, 128>}, {transform_indices = @transform_5, window_bounds = array<i64: 8, 128>}]} {
    %c0 = arith.constant 0 : index
    %c0_0 = arith.constant 0 : index
    %0 = vector.load %arg1[%c0, %c0_0] : memref<8x16xf32, #tpu.memory_space<vmem>>, vector<8x16xf32>
    %1 = arith.truncf %0 : vector<8x16xf32> to vector<8x16xbf16>
    %c0_1 = arith.constant 0 : index
    %c0_2 = arith.constant 0 : index
    %2 = vector.load %arg2[%c0_1, %c0_2] : memref<16x128xbf16, #tpu.memory_space<vmem>>, vector<16x128xbf16>
    %cst = arith.constant dense<0.000000e+00> : vector<8x128xf32>
    %3 = tpu.matmul %1, %2, %cst {dimension_numbers = #tpu.dot_dimension_numbers<[1], [0], [0], [1], [0, 0, 1, 1], [], []>} : vector<8x16xbf16>, vector<16x128xbf16>, vector<8x128xf32> -> vector<8x128xf32>
    %c0_3 = arith.constant 0 : index
    %c0_4 = arith.constant 0 : index
    %c0_5 = arith.constant 0 : index
    %4 = vector.load %arg5[%c0_3, %c0_4, %c0_5] : memref<4x1x128xf32, #tpu.memory_space<vmem>>, vector<1x1x128xf32>
    %5 = vector.shape_cast %4 : vector<1x1x128xf32> to vector<1x128xf32>
    %6 = vector.broadcast %5 : vector<1x128xf32> to vector<8x128xf32>
    %7 = arith.addf %3, %6 : vector<8x128xf32>
    %8 = math.tanh %7 : vector<8x128xf32>
    %9 = arith.truncf %8 : vector<8x128xf32> to vector<8x128xbf16>
    %c0_6 = arith.constant 0 : index
    %c0_7 = arith.constant 0 : index
    %c0_8 = arith.constant 0 : index
    %10 = vector.load %arg3[%c0_6, %c0_7, %c0_8] : memref<2x128x128xbf16, #tpu.memory_space<vmem>>, vector<1x128x128xbf16>
    %11 = vector.shape_cast %10 : vector<1x128x128xbf16> to vector<128x128xbf16>
    %cst_9 = arith.constant dense<0.000000e+00> : vector<8x128xf32>
    %12 = tpu.matmul %9, %11, %cst_9 {dimension_numbers = #tpu.dot_dimension_numbers<[1], [0], [0], [1], [0, 0, 1, 1], [], []>} : vector<8x128xbf16>, vector<128x128xbf16>, vector<8x128xf32> -> vector<8x128xf32>
    %c1 = arith.constant 1 : index
    %c0_10 = arith.constant 0 : index
    %c0_11 = arith.constant 0 : index
    %13 = vector.load %arg5[%c1, %c0_10, %c0_11] : memref<4x1x128xf32, #tpu.memory_space<vmem>>, vector<1x1x128xf32>
    %14 = vector.shape_cast %13 : vector<1x1x128xf32> to vector<1x128xf32>
    %15 = vector.broadcast %14 : vector<1x128xf32> to vector<8x128xf32>
    %16 = arith.addf %12, %15 : vector<8x128xf32>
    %17 = math.tanh %16 : vector<8x128xf32>
    %18 = arith.truncf %17 : vector<8x128xf32> to vector<8x128xbf16>
    %c1_12 = arith.constant 1 : index
    %c0_13 = arith.constant 0 : index
    %c0_14 = arith.constant 0 : index
    %19 = vector.load %arg3[%c1_12, %c0_13, %c0_14] : memref<2x128x128xbf16, #tpu.memory_space<vmem>>, vector<1x128x128xbf16>
    %20 = vector.shape_cast %19 : vector<1x128x128xbf16> to vector<128x128xbf16>
    %cst_15 = arith.constant dense<0.000000e+00> : vector<8x128xf32>
    %21 = tpu.matmul %18, %20, %cst_15 {dimension_numbers = #tpu.dot_dimension_numbers<[1], [0], [0], [1], [0, 0, 1, 1], [], []>} : vector<8x128xbf16>, vector<128x128xbf16>, vector<8x128xf32> -> vector<8x128xf32>
    %c2 = arith.constant 2 : index
    %c0_16 = arith.constant 0 : index
    %c0_17 = arith.constant 0 : index
    %22 = vector.load %arg5[%c2, %c0_16, %c0_17] : memref<4x1x128xf32, #tpu.memory_space<vmem>>, vector<1x1x128xf32>
    %23 = vector.shape_cast %22 : vector<1x1x128xf32> to vector<1x128xf32>
    %24 = vector.broadcast %23 : vector<1x128xf32> to vector<8x128xf32>
    %25 = arith.addf %21, %24 : vector<8x128xf32>
    %26 = math.tanh %25 : vector<8x128xf32>
    %c0_18 = arith.constant 0 : index
    %c0_19 = arith.constant 0 : index
    %27 = vector.load %arg4[%c0_18, %c0_19] : memref<128x128xf32, #tpu.memory_space<vmem>>, vector<128x128xf32>
    %cst_20 = arith.constant dense<0.000000e+00> : vector<8x128xf32>
    %28 = tpu.matmul %26, %27, %cst_20 {dimension_numbers = #tpu.dot_dimension_numbers<[1], [0], [0], [1], [0, 0, 1, 1], [], []>} : vector<8x128xf32>, vector<128x128xf32>, vector<8x128xf32> -> vector<8x128xf32>
    %c3 = arith.constant 3 : index
    %c0_21 = arith.constant 0 : index
    %c0_22 = arith.constant 0 : index
    %29 = vector.load %arg5[%c3, %c0_21, %c0_22] : memref<4x1x128xf32, #tpu.memory_space<vmem>>, vector<1x1x128xf32>
    %30 = vector.shape_cast %29 : vector<1x1x128xf32> to vector<1x128xf32>
    %31 = vector.broadcast %30 : vector<1x128xf32> to vector<8x128xf32>
    %32 = arith.addf %28, %31 : vector<8x128xf32>
    %c0_23 = arith.constant 0 : index
    %c0_24 = arith.constant 0 : index
    %33 = vector.load %arg6[%c0_23, %c0_24] : memref<8x128xf32, #tpu.memory_space<vmem>>, vector<8x128xf32>
    tpu.vector_store %arg6[%c0_23, %c0_24], %32 {strides = array<i32>} : memref<8x128xf32, #tpu.memory_space<vmem>>, vector<8x128xf32>,
    return
  }
  func.func @transform_0(%arg0: i32) -> (i32, i32) {
    %c0_i32 = arith.constant 0 : i32
    %c0_i32_0 = arith.constant 0 : i32
    return %arg0, %c0_i32 : i32, i32
  }
  func.func @transform_1(%arg0: i32) -> (i32, i32) {
    %c0_i32 = arith.constant 0 : i32
    %c0_i32_0 = arith.constant 0 : i32
    %c0_i32_1 = arith.constant 0 : i32
    return %c0_i32, %c0_i32_0 : i32, i32
  }
  func.func @transform_2(%arg0: i32) -> (i32, i32, i32) {
    %c0_i32 = arith.constant 0 : i32
    %c0_i32_0 = arith.constant 0 : i32
    %c0_i32_1 = arith.constant 0 : i32
    %c0_i32_2 = arith.constant 0 : i32
    return %c0_i32, %c0_i32_0, %c0_i32_1 : i32, i32, i32
  }
  func.func @transform_3(%arg0: i32) -> (i32, i32) {
    %c0_i32 = arith.constant 0 : i32
    %c0_i32_0 = arith.constant 0 : i32
    %c0_i32_1 = arith.constant 0 : i32
    return %c0_i32, %c0_i32_0 : i32, i32
  }
  func.func @transform_4(%arg0: i32) -> (i32, i32, i32) {
    %c0_i32 = arith.constant 0 : i32
    %c0_i32_0 = arith.constant 0 : i32
    %c0_i32_1 = arith.constant 0 : i32
    %c0_i32_2 = arith.constant 0 : i32
    return %c0_i32, %c0_i32_0, %c0_i32_1 : i32, i32, i32
  }
  func.func @transform_5(%arg0: i32) -> (i32, i32) {
    %c0_i32 = arith.constant 0 : i32
    %c0_i32_0 = arith.constant 0 : i32
    return %arg0, %c0_i32 : i32, i32
  }
}

</mosaic_0001>

<llo_original>
// kernel: tpu_custom_call.1
$region0: #{tpu_custom_call.1}
  #allocation0 [shape = 'u32[]', space=smem, size = 0x4, offset = 0x4, fixed_abs, tag = 'smem constant byte address 0x4 - core index']
  #allocation1 [shape = 'u32[72,128]{1,0:T(1,128)}', space=vmem, size = 0x9000, scoped, tag = 'internal scratch']
  %s0 = inlined_call_operand.hbm [shape: f32[8,16], index: 0, kind: input, shape index: {}]
  %s1 = inlined_call_operand.hbm [shape: bf16[16,128], index: 1, kind: input, shape index: {}]
  %s2 = inlined_call_operand.hbm [shape: bf16[2,128,128], index: 2, kind: input, shape index: {}]
  %s3 = inlined_call_operand.hbm [shape: f32[128,128], index: 3, kind: input, shape index: {}]
  %s4 = inlined_call_operand.hbm [shape: f32[4,1,128], index: 4, kind: input, shape index: {}]
  %s5 = inlined_call_operand.hbm [shape: f32[8,128], index: 5, kind: output, shape index: {}]
  %s6 = sld [smem:[#allocation0]]
  $region50: #{tpu_custom_call.1} parent=0
    _
  %s8 = ssub.s32 1, %s6
  %s9 = scalar_select 0, %s8, %s6
  $region1: #{tpu_custom_call.1} parent=0
    #allocation2 [shape = 'u8[4096]{0}', space=vmem, size = 0x1000, scoped, tag = 'input window, operand 0, single buffered']
    #allocation3 [shape = 's32[1]{0}', space=sflag, size = 0x4, scoped, tag = 'scoped memory for tpu_custom_call.1']
    #allocation4 [shape = 's32[1]{0}', space=sflag, size = 0x4, scoped, tag = 'scoped memory for tpu_custom_call.1']
    #allocation5 [shape = 'u8[4096]{0}', space=vmem, size = 0x1000, scoped, tag = 'input window, operand 1, single buffered']
    #allocation6 [shape = 's32[1]{0}', space=sflag, size = 0x4, scoped, tag = 'scoped memory for tpu_custom_call.1']
    #allocation7 [shape = 'u8[65536]{0}', space=vmem, size = 0x10000, scoped, tag = 'input window, operand 2, single buffered']
    #allocation8 [shape = 'u8[65536]{0}', space=vmem, size = 0x10000, scoped, tag = 'input window, operand 3, single buffered']
    #allocation9 [shape = 's32[1]{0}', space=sflag, size = 0x4, scoped, tag = 'scoped memory for tpu_custom_call.1']
    #allocation10 [shape = 'u8[2048]{0}', space=vmem, size = 0x800, scoped, tag = 'input window, operand 4, single buffered']
    #allocation11 [shape = 'u8[4096]{0}', space=vmem, size = 0x1000, scoped, tag = 'output window, operand 0, single buffered']
    %10 = vsyncpa [#allocation3], 0
    %11 = vsyncpa [#allocation6], 0
    %12 = vsyncpa [#allocation9], 0
    %13 = vsyncpa [#allocation4], 0
    // Predicated region
    $region2: #{tpu_custom_call.1} parent=1 // pred_check
      _
    $region3: #{tpu_custom_call.1} parent=1 // pred_check_branch
      %15 = sbr.rel (0) target = $region5
    $region4: #{tpu_custom_call.1} parent=1 // pred_region
      %17 = vsyncadd [#allocation3], 0
      %s19 = sshll.u32 %s0, 4
      %s20 = int_to_ptr.hbm [resolvable:$true] %s19
      %s21 = sshll.u32 [#allocation2], 4
      %s22 = int_to_ptr.vmem [resolvable:$true] %s21
      %24 = dma.hbm_to_vmem [thread:$0]  %s20, 128, %s22, [#allocation3]
    $region5: #{tpu_custom_call.1} parent=1 // pred_fallthru
      _
    // Predicated region
    $region6: #{tpu_custom_call.1} parent=1 // pred_check
      _
    $region7: #{tpu_custom_call.1} parent=1 // pred_check_branch
      %26 = sbr.rel (0) target = $region9
    $region8: #{tpu_custom_call.1} parent=1 // pred_region
      %28 = vsyncadd [#allocation6], 0
      %s29 = sshll.u32 %s1, 4
      %s30 = int_to_ptr.hbm [resolvable:$true] %s29
      %s31 = sshll.u32 [#allocation5], 4
      %s32 = int_to_ptr.vmem [resolvable:$true] %s31
      %37 = dma.hbm_to_vmem [thread:$0]  %s30, 128, %s32, [#allocation6], 64, 64, 4
    $region9: #{tpu_custom_call.1} parent=1 // pred_fallthru
      _
    // Predicated region
    $region10: #{tpu_custom_call.1} parent=1 // pred_check
      _
    $region11: #{tpu_custom_call.1} parent=1 // pred_check_branch
      %39 = sbr.rel (0) target = $region13
    $region12: #{tpu_custom_call.1} parent=1 // pred_region
      %41 = vsyncadd [#allocation6], 0
      %s42 = sshll.u32 %s2, 4
      %s43 = int_to_ptr.hbm [resolvable:$true] %s42
      %s44 = sshll.u32 [#allocation7], 4
      %s45 = int_to_ptr.vmem [resolvable:$true] %s44
      %50 = dma.hbm_to_vmem [thread:$0]  %s43, 2048, %s45, [#allocation6], 64, 64, 4
    $region13: #{tpu_custom_call.1} parent=1 // pred_fallthru
      _
    // Predicated region
    $region14: #{tpu_custom_call.1} parent=1 // pred_check
      _
    $region15: #{tpu_custom_call.1} parent=1 // pred_check_branch
      %52 = sbr.rel (0) target = $region17
    $region16: #{tpu_custom_call.1} parent=1 // pred_region
      %54 = vsyncadd [#allocation9], 0
      %s55 = sshll.u32 %s3, 4
      %s56 = int_to_ptr.hbm [resolvable:$true] %s55
      %s57 = sshll.u32 [#allocation8], 4
      %s58 = int_to_ptr.vmem [resolvable:$true] %s57
      %63 = dma.hbm_to_vmem [thread:$0]  %s56, 2048, %s58, [#allocation9], 128, 128, 8
    $region17: #{tpu_custom_call.1} parent=1 // pred_fallthru
      _
    // Predicated region
    $region18: #{tpu_custom_call.1} parent=1 // pred_check
      _
    $region19: #{tpu_custom_call.1} parent=1 // pred_check_branch
      %65 = sbr.rel (0) target = $region21
    $region20: #{tpu_custom_call.1} parent=1 // pred_region
      %67 = vsyncadd [#allocation9], 0
      %s68 = sshll.u32 %s4, 4
      %s69 = int_to_ptr.hbm [resolvable:$true] %s68
      %s70 = sshll.u32 [#allocation10], 4
      %s71 = int_to_ptr.vmem [resolvable:$true] %s70
      %76 = dma.hbm_to_vmem [thread:$0]  %s69, 64, %s71, [#allocation9], 16, 16, 1
    $region21: #{tpu_custom_call.1} parent=1 // pred_fallthru
      _
    // Predicated region
    $region22: #{tpu_custom_call.1} parent=1 // pred_check
      _
    $region23: #{tpu_custom_call.1} parent=1 // pred_check_branch
      %78 = sbr.rel (0) target = $region25
    $region24: #{tpu_custom_call.1} parent=1 // pred_region
      %80 = dma.done [#allocation3], 128
    $region25: #{tpu_custom_call.1} parent=1 // pred_fallthru
      _
    // Predicated region
    $region26: #{tpu_custom_call.1} parent=1 // pred_check
      _
    $region27: #{tpu_custom_call.1} parent=1 // pred_check_branch
      %82 = sbr.rel (0) target = $region29
    $region28: #{tpu_custom_call.1} parent=1 // pred_region
      %84 = dma.done [#allocation6], 128
    $region29: #{tpu_custom_call.1} parent=1 // pred_fallthru
      _
    // Predicated region
    $region30: #{tpu_custom_call.1} parent=1 // pred_check
      _
    $region31: #{tpu_custom_call.1} parent=1 // pred_check_branch
      %86 = sbr.rel (0) target = $region33
    $region32: #{tpu_custom_call.1} parent=1 // pred_region
      %88 = dma.done [#allocation6], 2048
    $region33: #{tpu_custom_call.1} parent=1 // pred_fallthru
      _
    // Predicated region
    $region34: #{tpu_custom_call.1} parent=1 // pred_check
      _
    $region35: #{tpu_custom_call.1} parent=1 // pred_check_branch
      %90 = sbr.rel (0) target = $region37
    $region36: #{tpu_custom_call.1} parent=1 // pred_region
      %92 = dma.done [#allocation9], 2048
    $region37: #{tpu_custom_call.1} parent=1 // pred_fallthru
      _
    // Predicated region
    $region38: #{tpu_custom_call.1} parent=1 // pred_check
      _
    $region39: #{tpu_custom_call.1} parent=1 // pred_check_branch
      %94 = sbr.rel (0) target = $region41
    $region40: #{tpu_custom_call.1} parent=1 // pred_region
      %96 = dma.done [#allocation9], 64
    $region41: #{tpu_custom_call.1} parent=1 // pred_fallthru
      _
    %v98 = vld [vmem:[#allocation2] sm:$0xff]
    %v99 = vpack.c.bf16 %v98, %v98
    %v100 = vld [vmem:[#allocation5] sm:$0xf]
    %v101 = vld [vmem:[#allocation5 + $0x4] sm:$0xf]
    %v102 = vld [vmem:[#allocation10] sm:$0x1]
    %v104 = vperm.slane %v102, 0
    %v108 = vunpack.c.l.b16 %v100
    %v109 = vunpack.c.l.b16 %v101
    %v110 = vpack.c.b16 %v109, %v108
    %vm112 = vcmask 130048
    %v114 = vsel %vm112, %v99, 0
    %116 = vmatpush.bf16.msra.mxu0 0
    %117 = vmatpush.bf16.msra.mxu0 0
    %118 = vmatpush.bf16.msra.mxu0 0
    %119 = vmatpush.bf16.msra.mxu0 0
    %120 = vmatpush.bf16.msra.mxu0 0
    %121 = vmatpush.bf16.msra.mxu0 0
    %122 = vmatpush.bf16.msra.mxu0 0
    %123 = vmatpush.bf16.msra.mxu0 %v110
    %124 = vmatmul.bf16.gmra.mxu0 %v114
    %v125 = vpop.f32.mrf.mxu0
    %v126 = vadd.f32 %v104, %v125
    %v127 = vpop.f32.mrf.mxu0
    %128 = vdwg.mxu0
    %v129 = vtanh.pop %v126
    %v130 = vpack.c.bf16 %v129, %v129
    %v131 = vld [vmem:[#allocation7] sm:$0xf]
    %v132 = vld [vmem:[#allocation7 + $0x4] sm:$0xf]
    %v133 = vld [vmem:[#allocation7 + $0x8] sm:$0xf]
    %v134 = vld [vmem:[#allocation7 + $0xc] sm:$0xf]
    %v135 = vld [vmem:[#allocation7 + $0x10] sm:$0xf]
    %v136 = vld [vmem:[#allocation7 + $0x14] sm:$0xf]
    %v137 = vld [vmem:[#allocation7 + $0x18] sm:$0xf]
    %v138 = vld [vmem:[#allocation7 + $0x1c] sm:$0xf]
    %v139 = vld [vmem:[#allocation7 + $0x20] sm:$0xf]
    %v140 = vld [vmem:[#allocation7 + $0x24] sm:$0xf]
    %v141 = vld [vmem:[#allocation7 + $0x28] sm:$0xf]
    %v142 = vld [vmem:[#allocation7 + $0x2c] sm:$0xf]
    %v143 = vld [vmem:[#allocation7 + $0x30] sm:$0xf]
    %v144 = vld [vmem:[#allocation7 + $0x34] sm:$0xf]
    %v145 = vld [vmem:[#allocation7 + $0x38] sm:$0xf]
    %v146 = vld [vmem:[#allocation7 + $0x3c] sm:$0xf]
    %s147 = scalar_lea.vmem [#allocation10], 1
    %v148 = vld [vmem:[%s147] sm:$0x1]
    %v150 = vperm.slane %v148, 0
    %v168 = vunpack.c.l.b16 %v131
    %v169 = vunpack.c.l.b16 %v132
    %v170 = vunpack.c.l.b16 %v133
    %v171 = vunpack.c.l.b16 %v134
    %v172 = vunpack.c.l.b16 %v135
    %v173 = vunpack.c.l.b16 %v136
    %v174 = vunpack.c.l.b16 %v137
    %v175 = vunpack.c.l.b16 %v138
    %v176 = vunpack.c.l.b16 %v139
    %v177 = vunpack.c.l.b16 %v140
    %v178 = vunpack.c.l.b16 %v141
    %v179 = vunpack.c.l.b16 %v142
    %v180 = vunpack.c.l.b16 %v143
    %v181 = vunpack.c.l.b16 %v144
    %v182 = vunpack.c.l.b16 %v145
    %v183 = vunpack.c.l.b16 %v146
    %v184 = vpack.c.b16 %v169, %v168
    %v185 = vpack.c.b16 %v171, %v170
    %v186 = vpack.c.b16 %v173, %v172
    %v187 = vpack.c.b16 %v175, %v174
    %v188 = vpack.c.b16 %v177, %v176
    %v189 = vpack.c.b16 %v179, %v178
    %v190 = vpack.c.b16 %v181, %v180
    %v191 = vpack.c.b16 %v183, %v182
    %200 = vmatpush.bf16.msra.mxu0 %v191
    %201 = vmatpush.bf16.msra.mxu0 %v190
    %202 = vmatpush.bf16.msra.mxu0 %v189
    %203 = vmatpush.bf16.msra.mxu0 %v188
    %204 = vmatpush.bf16.msra.mxu0 %v187
    %205 = vmatpush.bf16.msra.mxu0 %v186
    %206 = vmatpush.bf16.msra.mxu0 %v185
    %207 = vmatpush.bf16.msra.mxu0 %v184
    %208 = vmatmul.bf16.gmra.mxu0 %v130
    %v209 = vpop.f32.mrf.mxu0
    %v210 = vadd.f32 %v150, %v209
    %v211 = vpop.f32.mrf.mxu0
    %212 = vdwg.mxu0
    %v213 = vtanh.pop %v210
    %v214 = vpack.c.bf16 %v213, %v213
    %s215 = scalar_lea.vmem [#allocation7], 64
    %v216 = vld [vmem:[%s215] sm:$0xf]
    %v217 = vld [vmem:[%s215 + $0x4] sm:$0xf]
    %v218 = vld [vmem:[%s215 + $0x8] sm:$0xf]
    %v219 = vld [vmem:[%s215 + $0xc] sm:$0xf]
    %v220 = vld [vmem:[%s215 + $0x10] sm:$0xf]
    %v221 = vld [vmem:[%s215 + $0x14] sm:$0xf]
    %v222 = vld [vmem:[%s215 + $0x18] sm:$0xf]
    %v223 = vld [vmem:[%s215 + $0x1c] sm:$0xf]
    %v224 = vld [vmem:[%s215 + $0x20] sm:$0xf]
    %v225 = vld [vmem:[%s215 + $0x24] sm:$0xf]
    %v226 = vld [vmem:[%s215 + $0x28] sm:$0xf]
    %v227 = vld [vmem:[%s215 + $0x2c] sm:$0xf]
    %v228 = vld [vmem:[%s215 + $0x30] sm:$0xf]
    %v229 = vld [vmem:[%s215 + $0x34] sm:$0xf]
    %v230 = vld [vmem:[%s215 + $0x38] sm:$0xf]
    %v231 = vld [vmem:[%s215 + $0x3c] sm:$0xf]
    %s232 = scalar_lea.vmem [#allocation10], 2
    %v233 = vld [vmem:[%s232] sm:$0x1]
    %v235 = vperm.slane %v233, 0
    %v253 = vunpack.c.l.b16 %v216
    %v254 = vunpack.c.l.b16 %v217
    %v255 = vunpack.c.l.b16 %v218
    %v256 = vunpack.c.l.b16 %v219
    %v257 = vunpack.c.l.b16 %v220
    %v258 = vunpack.c.l.b16 %v221
    %v259 = vunpack.c.l.b16 %v222
    %v260 = vunpack.c.l.b16 %v223
    %v261 = vunpack.c.l.b16 %v224
    %v262 = vunpack.c.l.b16 %v225
    %v263 = vunpack.c.l.b16 %v226
    %v264 = vunpack.c.l.b16 %v227
    %v265 = vunpack.c.l.b16 %v228
    %v266 = vunpack.c.l.b16 %v229
    %v267 = vunpack.c.l.b16 %v230
    %v268 = vunpack.c.l.b16 %v231
    %v269 = vpack.c.b16 %v254, %v253
    %v270 = vpack.c.b16 %v256, %v255
    %v271 = vpack.c.b16 %v258, %v257
    %v272 = vpack.c.b16 %v260, %v259
    %v273 = vpack.c.b16 %v262, %v261
    %v274 = vpack.c.b16 %v264, %v263
    %v275 = vpack.c.b16 %v266, %v265
    %v276 = vpack.c.b16 %v268, %v267
    %285 = vmatpush.bf16.msra.mxu0 %v276
    %286 = vmatpush.bf16.msra.mxu0 %v275
    %287 = vmatpush.bf16.msra.mxu0 %v274
    %288 = vmatpush.bf16.msra.mxu0 %v273
    %289 = vmatpush.bf16.msra.mxu0 %v272
    %290 = vmatpush.bf16.msra.mxu0 %v271
    %291 = vmatpush.bf16.msra.mxu0 %v270
    %292 = vmatpush.bf16.msra.mxu0 %v269
    %293 = vmatmul.bf16.gmra.mxu0 %v214
    %v294 = vpop.f32.mrf.mxu0
    %v295 = vadd.f32 %v235, %v294
    %v296 = vpop.f32.mrf.mxu0
    %297 = vdwg.mxu0
    %v298 = vtanh.pop %v295
    %v299 = vld [vmem:[#allocation8] sm:$0xff]
    %v300 = vld [vmem:[#allocation8 + $0x8] sm:$0xff]
    %v301 = vld [vmem:[#allocation8 + $0x10] sm:$0xff]
    %v302 = vld [vmem:[#allocation8 + $0x18] sm:$0xff]
    %v303 = vld [vmem:[#allocation8 + $0x20] sm:$0xff]
    %v304 = vld [vmem:[#allocation8 + $0x28] sm:$0xff]
    %v305 = vld [vmem:[#allocation8 + $0x30] sm:$0xff]
    %v306 = vld [vmem:[#allocation8 + $0x38] sm:$0xff]
    %v307 = vld [vmem:[#allocation8 + $0x40] sm:$0xff]
    %v308 = vld [vmem:[#allocation8 + $0x48] sm:$0xff]
    %v309 = vld [vmem:[#allocation8 + $0x50] sm:$0xff]
    %v310 = vld [vmem:[#allocation8 + $0x58] sm:$0xff]
    %v311 = vld [vmem:[#allocation8 + $0x60] sm:$0xff]
    %v312 = vld [vmem:[#allocation8 + $0x68] sm:$0xff]
    %v313 = vld [vmem:[#allocation8 + $0x70] sm:$0xff]
    %v314 = vld [vmem:[#allocation8 + $0x78] sm:$0xff]
    %s315 = scalar_lea.vmem [#allocation10], 3
    %v316 = vld [vmem:[%s315] sm:$0x1]
    %v318 = vperm.slane %v316, 0
    %320 = vmatpush.msra.mxu0 %v314
    %321 = vmatpush.msra.mxu0 %v313
    %322 = vmatpush.msra.mxu0 %v312
    %323 = vmatpush.msra.mxu0 %v311
    %324 = vmatpush.msra.mxu0 %v310
    %325 = vmatpush.msra.mxu0 %v309
    %326 = vmatpush.msra.mxu0 %v308
    %327 = vmatpush.msra.mxu0 %v307
    %328 = vmatpush.msra.mxu0 %v306
    %329 = vmatpush.msra.mxu0 %v305
    %330 = vmatpush.msra.mxu0 %v304
    %331 = vmatpush.msra.mxu0 %v303
    %332 = vmatpush.msra.mxu0 %v302
    %333 = vmatpush.msra.mxu0 %v301
    %334 = vmatpush.msra.mxu0 %v300
    %335 = vmatpush.msra.mxu0 %v299
    %336 = vmatmul.f32.gmra.mxu0 %v298
    %v337 = vpop.f32.mrf.mxu0
    %v338 = vadd.f32 %v318, %v337
    %339 = vdwg.mxu0
    %340 = vst [vmem:[#allocation11] sm:$0xff] %v338
    // Predicated region
    $region42: #{tpu_custom_call.1} parent=1 // pred_check
      _
    $region43: #{tpu_custom_call.1} parent=1 // pred_check_branch
      %342 = sbr.rel (0) target = $region45
    $region44: #{tpu_custom_call.1} parent=1 // pred_region
      %344 = vsyncadd [#allocation4], 0
      %s346 = sshll.u32 [#allocation11], 4
      %s347 = int_to_ptr.vmem [resolvable:$true] %s346
      %s348 = sshll.u32 %s5, 4
      %s349 = int_to_ptr.hbm [resolvable:$true] %s348
      %351 = dma.vmem_to_hbm [thread:$0]  %s347, 128, %s349, [#allocation4]
    $region45: #{tpu_custom_call.1} parent=1 // pred_fallthru
      _
    // Predicated region
    $region46: #{tpu_custom_call.1} parent=1 // pred_check
      _
    $region47: #{tpu_custom_call.1} parent=1 // pred_check_branch
      %353 = sbr.rel (0) target = $region49
    $region48: #{tpu_custom_call.1} parent=1 // pred_region
      %355 = dma.done [#allocation4], 128
    $region49: #{tpu_custom_call.1} parent=1 // pred_fallthru
      _
    %356 = vsyncpa [#allocation3], 1
    %357 = vsyncpa [#allocation6], 1
    %358 = vsyncpa [#allocation9], 1
    %359 = vsyncpa [#allocation4], 1

</llo_original>
